<compile_context>
chip_gen: v7x
topology: tpu7x:2x2x1
jax: 0.10.0
libtpu: 0.0.40
codegen_flags: <defaults>
</compile_context>

<pallas_src>
import functools

import jax
import jax.numpy as jnp
from jax.experimental import pallas as pl
from jax.experimental.pallas import tpu as pltpu

LN_EPS = 1e-5


def _round_up(x, m):
    return (x + m - 1) // m * m


def _layernorm(x, gamma, beta, dim):
    """Standard per-row LayerNorm over the lane dim (biased variance).

    Single-pass E[x^2] - mean^2 form: both lane reductions are independent,
    shortening the reduce->subtract->square->reduce dependency chain.
    """
    inv_n = jnp.float32(1.0 / dim)
    mean = jnp.sum(x, axis=-1, keepdims=True) * inv_n
    mean_sq = jnp.sum(x * x, axis=-1, keepdims=True) * inv_n
    var = jnp.maximum(mean_sq - mean * mean, 0.0)
    return (x - mean) * jax.lax.rsqrt(var + LN_EPS) * gamma + beta


def critic_kernel(
    state_ref, action_ref,
    w13_ref, b13_ref, g13_ref, be13_ref,   # fc1||fc3 + bn1||bn3 (lane-concat)
    w2_ref, w4_ref,                        # per-head layer-2 weights
    b24_ref, g24_ref, be24_ref,            # b2||b4, bn2||bn4 (lane-concat)
    wa_ref, ba_ref,                        # sep_action || sep_action2
    wq_ref, bq_ref,                        # q-head rows (1, 2*l2), biases (1, 2)
    out_ref,                               # (TB, 2): [:, 0]=q1, [:, 1]=q2
    *, l1_dim, l2_dim, mm_dtype,
):
    state = state_ref[...]
    action = action_ref[...]

    # Layer 1 for both heads in one MXU push (lanes [0,l1)=head1, rest=head2).
    s = jnp.dot(state, w13_ref[...], preferred_element_type=jnp.float32) + b13_ref[...]

    g13 = g13_ref[...]
    be13 = be13_ref[...]
    s1 = jnp.maximum(
        _layernorm(s[:, :l1_dim], g13[:, :l1_dim], be13[:, :l1_dim], l1_dim), 0.0)
    s2 = jnp.maximum(
        _layernorm(s[:, l1_dim:], g13[:, l1_dim:], be13[:, l1_dim:], l1_dim), 0.0)

    # Layer 2: two per-head dots (half the FLOPs / bytes of a block-diag matmul).
    b24 = b24_ref[...]
    g24 = g24_ref[...]
    be24 = be24_ref[...]
    t1 = jnp.dot(s1.astype(mm_dtype), w2_ref[...],
                 preferred_element_type=jnp.float32) + b24[:, :l2_dim]
    t2 = jnp.dot(s2.astype(mm_dtype), w4_ref[...],
                 preferred_element_type=jnp.float32) + b24[:, l2_dim:]
    t1 = _layernorm(t1, g24[:, :l2_dim], be24[:, :l2_dim], l2_dim)
    t2 = _layernorm(t2, g24[:, l2_dim:], be24[:, l2_dim:], l2_dim)

    # Separate action layer (both heads fused in one dot).
    a = jnp.dot(action, wa_ref[...], preferred_element_type=jnp.float32) + ba_ref[...]
    a = jnp.maximum(a, 0.0)

    q1 = jnp.maximum(t1 + a[:, :l2_dim], 0.0)
    q2 = jnp.maximum(t2 + a[:, l2_dim:], 0.0)

    # q-head: VPU multiply + XLU lane reduction per head (no N=1 MXU matmul,
    # no masks), writing each head's column directly.
    wq = wq_ref[...]
    bq = bq_ref[...]
    out_ref[:, 0:1] = (jnp.sum(q1 * wq[:, :l2_dim], axis=-1, keepdims=True)
                       + bq[:, 0:1])
    out_ref[:, 1:2] = (jnp.sum(q2 * wq[:, l2_dim:], axis=-1, keepdims=True)
                       + bq[:, 1:2])


def fuse_params(params):
    """Fuse the 24 per-head params (head1 then head2) into 13 arrays.

    Layer-1 / action / q-head params are lane-concatenated (head1 then head2);
    the layer-2 weights are kept SEPARATE (no block-diagonal zero padding).
    """
    (w1, b1, g1, be1, w2, b2, g2, be2, wa, ba, wq, bq,
     w3, b3, g3, be3, w4, b4, g4, be4, wa2, ba2, wq2, bq2) = params
    return [
        jnp.concatenate([w1, w3], axis=1),        # (state_dim, 2*l1)
        jnp.concatenate([b1, b3], axis=1),        # (1, 2*l1)
        jnp.concatenate([g1, g3], axis=1),
        jnp.concatenate([be1, be3], axis=1),
        w2,                                       # (l1, l2)
        w4,                                       # (l1, l2)
        jnp.concatenate([b2, b4], axis=1),        # (1, 2*l2)
        jnp.concatenate([g2, g4], axis=1),
        jnp.concatenate([be2, be4], axis=1),
        jnp.concatenate([wa, wa2], axis=1),       # (action_dim, 2*l2)
        jnp.concatenate([ba, ba2], axis=1),
        jnp.concatenate([wq.T, wq2.T], axis=1),   # (1, 2*l2) q-head rows
        jnp.concatenate([bq, bq2], axis=1),       # (1, 2)
    ]


def critic_forward(state, action, params, *, tile_batch=1024, use_bf16=True):
    """params: flat list of 24 arrays (head1's 12 then head2's 12)."""
    batch, state_dim = state.shape
    action_dim = action.shape[1]
    fused = fuse_params(params)
    l1_dim = fused[4].shape[0]
    l2_dim = fused[4].shape[1]

    # Batch tile: multiple of the 8-row sublane tile; keep >= 2 grid steps
    # when batch > 8 so the "parallel" axis can shard across v7x's two TCs.
    tb = min(tile_batch, _round_up(batch, 8))
    if batch > 8:
        tb = min(tb, _round_up((batch + 1) // 2, 8))
    b_pad = _round_up(batch, tb)
    if b_pad != batch:
        pad = b_pad - batch
        state = jnp.pad(state, ((0, pad), (0, 0)))
        action = jnp.pad(action, ((0, pad), (0, 0)))

    mm_dtype = jnp.float32
    if use_bf16:
        mm_dtype = jnp.bfloat16
        state = state.astype(jnp.bfloat16)
        action = action.astype(jnp.bfloat16)
        for idx in (0, 4, 5, 9):                  # MXU weight operands only
            fused[idx] = fused[idx].astype(jnp.bfloat16)

    # VMEM budget: true footprint (2x batch-tiled I/O, resident params counted
    # double-buffered to stay conservative, f32 body temporaries) + headroom,
    # clamped to physical VMEM minus 16 MiB of compiler scratch.
    item = 2 if use_bf16 else 4
    io_bytes = 2 * tb * (state_dim * item + action_dim * item + 2 * 4)
    param_bytes = 2 * sum(int(p.size) * p.dtype.itemsize for p in fused)
    interm_bytes = 4 * tb * (4 * l1_dim + 8 * l2_dim)
    try:
        phys_vmem = int(pltpu.get_tpu_info().vmem_capacity_bytes)
    except Exception:
        phys_vmem = 64 << 20                      # conservative (v7x)
    ceiling = min(max(phys_vmem - (16 << 20), 32 << 20), 100 << 20)
    vmem_bytes = int(min(max(io_bytes + param_bytes + interm_bytes + (8 << 20),
                             16 << 20), ceiling))

    batch_spec = lambda feat: pl.BlockSpec((tb, feat), lambda i: (i, 0))
    # Resident params: constant index_map -> fetched once, kept in VMEM.
    resident_specs = [pl.BlockSpec(tuple(p.shape), lambda i: (0, 0)) for p in fused]

    kernel = functools.partial(critic_kernel, l1_dim=l1_dim, l2_dim=l2_dim,
                               mm_dtype=mm_dtype)
    out = pl.pallas_call(
        kernel,
        out_shape=jax.ShapeDtypeStruct((b_pad, 2), jnp.float32),
        grid_spec=pltpu.PrefetchScalarGridSpec(
            num_scalar_prefetch=0,
            grid=(b_pad // tb,),
            in_specs=[batch_spec(state_dim), batch_spec(action_dim)] + resident_specs,
            out_specs=pl.BlockSpec((tb, 2), lambda i: (i, 0)),
        ),
        compiler_params=pltpu.CompilerParams(
            dimension_semantics=("parallel",),
            vmem_limit_bytes=vmem_bytes,
        ),
    )(state, action, *fused)
    return out[:batch, 0:1], out[:batch, 1:2]


# ---------------------------------------------------------------------------
# Parameter init (mirrors Critic.build_network) and pure-JAX reference.
# ---------------------------------------------------------------------------

def _uniform(key, shape, bound):
    return jax.random.uniform(key, shape, jnp.float32, -bound, bound)


def make_params(key, state_dim, action_dim, l1_dim, l2_dim):
    """Weights returned pre-transposed to (in, out); biases/gamma/beta as (1, F).

    init_layer uses weight.size()[0] == out_features as the 'fan-in' bound
    (exactly what the reference PyTorch code does); the separate_action_layer
    keeps PyTorch's default Linear init; q-head uses bound 0.003.
    """
    keys = iter(jax.random.split(key, 32))

    def linear(in_dim, out_dim, bound):
        w = _uniform(next(keys), (in_dim, out_dim), bound)
        b = _uniform(next(keys), (1, out_dim), bound)
        return w, b

    def ln(dim):
        return jnp.ones((1, dim), jnp.float32), jnp.zeros((1, dim), jnp.float32)

    def head():
        w1, b1 = linear(state_dim, l1_dim, 1.0 / jnp.sqrt(l1_dim))
        g1, be1 = ln(l1_dim)
        w2, b2 = linear(l1_dim, l2_dim, 1.0 / jnp.sqrt(l2_dim))
        g2, be2 = ln(l2_dim)
        wa, ba = linear(action_dim, l2_dim, 1.0 / jnp.sqrt(action_dim))
        wq, bq = linear(l2_dim, 1, 0.003)
        return [w1, b1, g1, be1, w2, b2, g2, be2, wa, ba, wq, bq]

    return head() + head()


def _layernorm_ref(x, gamma, beta):
    mean = jnp.mean(x, axis=-1, keepdims=True)
    var = jnp.mean((x - mean) ** 2, axis=-1, keepdims=True)
    return (x - mean) * jax.lax.rsqrt(var + LN_EPS) * gamma + beta


def critic_reference(state, action, params):
    def head(p):
        w1, b1, g1, be1, w2, b2, g2, be2, wa, ba, wq, bq = p
        s = jnp.maximum(_layernorm_ref(state @ w1 + b1, g1, be1), 0.0)
        s = _layernorm_ref(s @ w2 + b2, g2, be2)
        a = jnp.maximum(action @ wa + ba, 0.0)
        q = jnp.maximum(s + a, 0.0)
        return q @ wq + bq
    return head(params[:12]), head(params[12:])


if __name__ == "__main__":
    batch, state_dim, action_dim, l1_dim, l2_dim = 4, 16, 4, 32, 32

    key = jax.random.PRNGKey(0)
    k_state, k_action, k_params = jax.random.split(key, 3)
    state = jax.random.normal(k_state, (batch, state_dim), jnp.float32)
    action = jax.random.normal(k_action, (batch, action_dim), jnp.float32)
    params = make_params(k_params, state_dim, action_dim, l1_dim, l2_dim)

    q1_ref, q2_ref = critic_reference(state, action, params)

    # f32 path (tight check against the reference).
    q1, q2 = jax.block_until_ready(
        critic_forward(state, action, params, use_bf16=False))
    assert q1.shape == (batch, 1) and q2.shape == (batch, 1)
    assert jnp.allclose(q1, q1_ref, atol=1e-3, rtol=1e-3)
    assert jnp.allclose(q2, q2_ref, atol=1e-3, rtol=1e-3)

    # Default path: bf16 MXU operands (halves HBM/VMEM traffic on v6e/v7x);
    # loose tolerance since activations/weights are bf16 on the MXU.
    q1b, q2b = jax.block_until_ready(critic_forward(state, action, params))
    assert jnp.allclose(q1b, q1_ref, atol=1e-1, rtol=1e-1)
    assert jnp.allclose(q2b, q2_ref, atol=1e-1, rtol=1e-1)

    print("KERNEL_OK")
</pallas_src>

<mosaic_0001>
module attributes {stable_mosaic.version = 11 : i64} {
  func.func @critic_kernel(%arg0: i32, %arg1: memref<8x16xf32, #tpu.memory_space<vmem>>, %arg2: memref<8x4xf32, #tpu.memory_space<vmem>>, %arg3: memref<16x64xf32, #tpu.memory_space<vmem>>, %arg4: memref<1x64xf32, #tpu.memory_space<vmem>>, %arg5: memref<1x64xf32, #tpu.memory_space<vmem>>, %arg6: memref<1x64xf32, #tpu.memory_space<vmem>>, %arg7: memref<32x32xf32, #tpu.memory_space<vmem>>, %arg8: memref<32x32xf32, #tpu.memory_space<vmem>>, %arg9: memref<1x64xf32, #tpu.memory_space<vmem>>, %arg10: memref<1x64xf32, #tpu.memory_space<vmem>>, %arg11: memref<1x64xf32, #tpu.memory_space<vmem>>, %arg12: memref<4x64xf32, #tpu.memory_space<vmem>>, %arg13: memref<1x64xf32, #tpu.memory_space<vmem>>, %arg14: memref<1x64xf32, #tpu.memory_space<vmem>>, %arg15: memref<1x2xf32, #tpu.memory_space<vmem>>, %arg16: memref<8x2xf32, #tpu.memory_space<vmem>>) attributes {dimension_semantics = [#tpu.dimension_semantics<parallel>], iteration_bounds = array<i64: 1>, scalar_prefetch = 0 : i64, scratch_operands = 0 : i64, tpu.core_type = #tpu.core_type<tc>, window_params = [{transform_indices = @transform_0, window_bounds = array<i64: 8, 16>}, {transform_indices = @transform_1, window_bounds = array<i64: 8, 4>}, {pipeline_mode = #tpu.pipeline_mode<synchronous>, transform_indices = @transform_2, window_bounds = array<i64: 16, 64>}, {pipeline_mode = #tpu.pipeline_mode<synchronous>, transform_indices = @transform_3, window_bounds = array<i64: 1, 64>}, {pipeline_mode = #tpu.pipeline_mode<synchronous>, transform_indices = @transform_4, window_bounds = array<i64: 1, 64>}, {pipeline_mode = #tpu.pipeline_mode<synchronous>, transform_indices = @transform_5, window_bounds = array<i64: 1, 64>}, {pipeline_mode = #tpu.pipeline_mode<synchronous>, transform_indices = @transform_6, window_bounds = array<i64: 32, 32>}, {pipeline_mode = #tpu.pipeline_mode<synchronous>, transform_indices = @transform_7, window_bounds = array<i64: 32, 32>}, {pipeline_mode = #tpu.pipeline_mode<synchronous>, transform_indices = @transform_8, window_bounds = array<i64: 1, 64>}, {pipeline_mode = #tpu.pipeline_mode<synchronous>, transform_indices = @transform_9, window_bounds = array<i64: 1, 64>}, {pipeline_mode = #tpu.pipeline_mode<synchronous>, transform_indices = @transform_10, window_bounds = array<i64: 1, 64>}, {pipeline_mode = #tpu.pipeline_mode<synchronous>, transform_indices = @transform_11, window_bounds = array<i64: 4, 64>}, {pipeline_mode = #tpu.pipeline_mode<synchronous>, transform_indices = @transform_12, window_bounds = array<i64: 1, 64>}, {pipeline_mode = #tpu.pipeline_mode<synchronous>, transform_indices = @transform_13, window_bounds = array<i64: 1, 64>}, {pipeline_mode = #tpu.pipeline_mode<synchronous>, transform_indices = @transform_14, window_bounds = array<i64: 1, 2>}, {transform_indices = @transform_15, window_bounds = array<i64: 8, 2>}]} {
    %c0 = arith.constant 0 : index
    %c0_0 = arith.constant 0 : index
    %0 = vector.load %arg1[%c0, %c0_0] : memref<8x16xf32, #tpu.memory_space<vmem>>, vector<8x16xf32>
    %c0_1 = arith.constant 0 : index
    %c0_2 = arith.constant 0 : index
    %1 = vector.load %arg2[%c0_1, %c0_2] : memref<8x4xf32, #tpu.memory_space<vmem>>, vector<8x4xf32>
    %c0_3 = arith.constant 0 : index
    %c0_4 = arith.constant 0 : index
    %2 = vector.load %arg3[%c0_3, %c0_4] : memref<16x64xf32, #tpu.memory_space<vmem>>, vector<16x64xf32>
    %cst = arith.constant dense<0.000000e+00> : vector<8x64xf32>
    %3 = tpu.matmul %0, %2, %cst {dimension_numbers = #tpu.dot_dimension_numbers<[1], [0], [0], [1], [0, 0, 1, 1], [], []>} : vector<8x16xf32>, vector<16x64xf32>, vector<8x64xf32> -> vector<8x64xf32>
    %c0_5 = arith.constant 0 : index
    %c0_6 = arith.constant 0 : index
    %4 = vector.load %arg4[%c0_5, %c0_6] : memref<1x64xf32, #tpu.memory_space<vmem>>, vector<1x64xf32>
    %5 = vector.broadcast %4 : vector<1x64xf32> to vector<8x64xf32>
    %6 = arith.addf %3, %5 : vector<8x64xf32>
    %c0_7 = arith.constant 0 : index
    %c0_8 = arith.constant 0 : index
    %7 = vector.load %arg5[%c0_7, %c0_8] : memref<1x64xf32, #tpu.memory_space<vmem>>, vector<1x64xf32>
    %c0_9 = arith.constant 0 : index
    %c0_10 = arith.constant 0 : index
    %8 = vector.load %arg6[%c0_9, %c0_10] : memref<1x64xf32, #tpu.memory_space<vmem>>, vector<1x64xf32>
    %9 = vector.extract_strided_slice %6 {offsets = [0, 0], sizes = [8, 32], strides = [1, 1]} : vector<8x64xf32> to vector<8x32xf32>
    %10 = vector.extract_strided_slice %7 {offsets = [0, 0], sizes = [1, 32], strides = [1, 1]} : vector<1x64xf32> to vector<1x32xf32>
    %11 = vector.extract_strided_slice %8 {offsets = [0, 0], sizes = [1, 32], strides = [1, 1]} : vector<1x64xf32> to vector<1x32xf32>
    %cst_11 = arith.constant dense<0.000000e+00> : vector<8xf32>
    %12 = vector.multi_reduction <add>, %9, %cst_11 [1] : vector<8x32xf32> to vector<8xf32>
    %13 = vector.shape_cast %12 : vector<8xf32> to vector<8x1xf32>
    %cst_12 = arith.constant 3.125000e-02 : f32
    %14 = vector.broadcast %cst_12 : f32 to vector<8x1xf32>
    %15 = arith.mulf %13, %14 : vector<8x1xf32>
    %16 = arith.mulf %9, %9 : vector<8x32xf32>
    %cst_13 = arith.constant dense<0.000000e+00> : vector<8xf32>
    %17 = vector.multi_reduction <add>, %16, %cst_13 [1] : vector<8x32xf32> to vector<8xf32>
    %18 = vector.shape_cast %17 : vector<8xf32> to vector<8x1xf32>
    %cst_14 = arith.constant 3.125000e-02 : f32
    %19 = vector.broadcast %cst_14 : f32 to vector<8x1xf32>
    %20 = arith.mulf %18, %19 : vector<8x1xf32>
    %21 = arith.mulf %15, %15 : vector<8x1xf32>
    %22 = arith.subf %20, %21 : vector<8x1xf32>
    %cst_15 = arith.constant 0.000000e+00 : f32
    %23 = vector.broadcast %cst_15 : f32 to vector<8x1xf32>
    %24 = arith.maximumf %22, %23 : vector<8x1xf32>
    %25 = vector.broadcast %15 : vector<8x1xf32> to vector<8x32xf32>
    %26 = arith.subf %9, %25 : vector<8x32xf32>
    %cst_16 = arith.constant 9.99999974E-6 : f32
    %27 = vector.broadcast %cst_16 : f32 to vector<8x1xf32>
    %28 = arith.addf %24, %27 : vector<8x1xf32>
    %29 = math.rsqrt %28 : vector<8x1xf32>
    %30 = vector.broadcast %29 : vector<8x1xf32> to vector<8x32xf32>
    %31 = arith.mulf %26, %30 : vector<8x32xf32>
    %32 = vector.broadcast %10 : vector<1x32xf32> to vector<8x32xf32>
    %33 = arith.mulf %31, %32 : vector<8x32xf32>
    %34 = vector.broadcast %11 : vector<1x32xf32> to vector<8x32xf32>
    %35 = arith.addf %33, %34 : vector<8x32xf32>
    %cst_17 = arith.constant 0.000000e+00 : f32
    %36 = vector.broadcast %cst_17 : f32 to vector<8x32xf32>
    %37 = arith.maximumf %35, %36 : vector<8x32xf32>
    %38 = vector.extract_strided_slice %6 {offsets = [0, 32], sizes = [8, 32], strides = [1, 1]} : vector<8x64xf32> to vector<8x32xf32>
    %39 = vector.extract_strided_slice %7 {offsets = [0, 32], sizes = [1, 32], strides = [1, 1]} : vector<1x64xf32> to vector<1x32xf32>
    %40 = vector.extract_strided_slice %8 {offsets = [0, 32], sizes = [1, 32], strides = [1, 1]} : vector<1x64xf32> to vector<1x32xf32>
    %cst_18 = arith.constant dense<0.000000e+00> : vector<8xf32>
    %41 = vector.multi_reduction <add>, %38, %cst_18 [1] : vector<8x32xf32> to vector<8xf32>
    %42 = vector.shape_cast %41 : vector<8xf32> to vector<8x1xf32>
    %cst_19 = arith.constant 3.125000e-02 : f32
    %43 = vector.broadcast %cst_19 : f32 to vector<8x1xf32>
    %44 = arith.mulf %42, %43 : vector<8x1xf32>
    %45 = arith.mulf %38, %38 : vector<8x32xf32>
    %cst_20 = arith.constant dense<0.000000e+00> : vector<8xf32>
    %46 = vector.multi_reduction <add>, %45, %cst_20 [1] : vector<8x32xf32> to vector<8xf32>
    %47 = vector.shape_cast %46 : vector<8xf32> to vector<8x1xf32>
    %cst_21 = arith.constant 3.125000e-02 : f32
    %48 = vector.broadcast %cst_21 : f32 to vector<8x1xf32>
    %49 = arith.mulf %47, %48 : vector<8x1xf32>
    %50 = arith.mulf %44, %44 : vector<8x1xf32>
    %51 = arith.subf %49, %50 : vector<8x1xf32>
    %cst_22 = arith.constant 0.000000e+00 : f32
    %52 = vector.broadcast %cst_22 : f32 to vector<8x1xf32>
    %53 = arith.maximumf %51, %52 : vector<8x1xf32>
    %54 = vector.broadcast %44 : vector<8x1xf32> to vector<8x32xf32>
    %55 = arith.subf %38, %54 : vector<8x32xf32>
    %cst_23 = arith.constant 9.99999974E-6 : f32
    %56 = vector.broadcast %cst_23 : f32 to vector<8x1xf32>
    %57 = arith.addf %53, %56 : vector<8x1xf32>
    %58 = math.rsqrt %57 : vector<8x1xf32>
    %59 = vector.broadcast %58 : vector<8x1xf32> to vector<8x32xf32>
    %60 = arith.mulf %55, %59 : vector<8x32xf32>
    %61 = vector.broadcast %39 : vector<1x32xf32> to vector<8x32xf32>
    %62 = arith.mulf %60, %61 : vector<8x32xf32>
    %63 = vector.broadcast %40 : vector<1x32xf32> to vector<8x32xf32>
    %64 = arith.addf %62, %63 : vector<8x32xf32>
    %cst_24 = arith.constant 0.000000e+00 : f32
    %65 = vector.broadcast %cst_24 : f32 to vector<8x32xf32>
    %66 = arith.maximumf %64, %65 : vector<8x32xf32>
    %c0_25 = arith.constant 0 : index
    %c0_26 = arith.constant 0 : index
    %67 = vector.load %arg9[%c0_25, %c0_26] : memref<1x64xf32, #tpu.memory_space<vmem>>, vector<1x64xf32>
    %c0_27 = arith.constant 0 : index
    %c0_28 = arith.constant 0 : index
    %68 = vector.load %arg10[%c0_27, %c0_28] : memref<1x64xf32, #tpu.memory_space<vmem>>, vector<1x64xf32>
    %c0_29 = arith.constant 0 : index
    %c0_30 = arith.constant 0 : index
    %69 = vector.load %arg11[%c0_29, %c0_30] : memref<1x64xf32, #tpu.memory_space<vmem>>, vector<1x64xf32>
    %c0_31 = arith.constant 0 : index
    %c0_32 = arith.constant 0 : index
    %70 = vector.load %arg7[%c0_31, %c0_32] : memref<32x32xf32, #tpu.memory_space<vmem>>, vector<32x32xf32>
    %cst_33 = arith.constant dense<0.000000e+00> : vector<8x32xf32>
    %71 = tpu.matmul %37, %70, %cst_33 {dimension_numbers = #tpu.dot_dimension_numbers<[1], [0], [0], [1], [0, 0, 1, 1], [], []>} : vector<8x32xf32>, vector<32x32xf32>, vector<8x32xf32> -> vector<8x32xf32>
    %72 = vector.extract_strided_slice %67 {offsets = [0, 0], sizes = [1, 32], strides = [1, 1]} : vector<1x64xf32> to vector<1x32xf32>
    %73 = vector.broadcast %72 : vector<1x32xf32> to vector<8x32xf32>
    %74 = arith.addf %71, %73 : vector<8x32xf32>
    %c0_34 = arith.constant 0 : index
    %c0_35 = arith.constant 0 : index
    %75 = vector.load %arg8[%c0_34, %c0_35] : memref<32x32xf32, #tpu.memory_space<vmem>>, vector<32x32xf32>
    %cst_36 = arith.constant dense<0.000000e+00> : vector<8x32xf32>
    %76 = tpu.matmul %66, %75, %cst_36 {dimension_numbers = #tpu.dot_dimension_numbers<[1], [0], [0], [1], [0, 0, 1, 1], [], []>} : vector<8x32xf32>, vector<32x32xf32>, vector<8x32xf32> -> vector<8x32xf32>
    %77 = vector.extract_strided_slice %67 {offsets = [0, 32], sizes = [1, 32], strides = [1, 1]} : vector<1x64xf32> to vector<1x32xf32>
    %78 = vector.broadcast %77 : vector<1x32xf32> to vector<8x32xf32>
    %79 = arith.addf %76, %78 : vector<8x32xf32>
    %80 = vector.extract_strided_slice %68 {offsets = [0, 0], sizes = [1, 32], strides = [1, 1]} : vector<1x64xf32> to vector<1x32xf32>
    %81 = vector.extract_strided_slice %69 {offsets = [0, 0], sizes = [1, 32], strides = [1, 1]} : vector<1x64xf32> to vector<1x32xf32>
    %cst_37 = arith.constant dense<0.000000e+00> : vector<8xf32>
    %82 = vector.multi_reduction <add>, %74, %cst_37 [1] : vector<8x32xf32> to vector<8xf32>
    %83 = vector.shape_cast %82 : vector<8xf32> to vector<8x1xf32>
    %cst_38 = arith.constant 3.125000e-02 : f32
    %84 = vector.broadcast %cst_38 : f32 to vector<8x1xf32>
    %85 = arith.mulf %83, %84 : vector<8x1xf32>
    %86 = arith.mulf %74, %74 : vector<8x32xf32>
    %cst_39 = arith.constant dense<0.000000e+00> : vector<8xf32>
    %87 = vector.multi_reduction <add>, %86, %cst_39 [1] : vector<8x32xf32> to vector<8xf32>
    %88 = vector.shape_cast %87 : vector<8xf32> to vector<8x1xf32>
    %cst_40 = arith.constant 3.125000e-02 : f32
    %89 = vector.broadcast %cst_40 : f32 to vector<8x1xf32>
    %90 = arith.mulf %88, %89 : vector<8x1xf32>
    %91 = arith.mulf %85, %85 : vector<8x1xf32>
    %92 = arith.subf %90, %91 : vector<8x1xf32>
    %cst_41 = arith.constant 0.000000e+00 : f32
    %93 = vector.broadcast %cst_41 : f32 to vector<8x1xf32>
    %94 = arith.maximumf %92, %93 : vector<8x1xf32>
    %95 = vector.broadcast %85 : vector<8x1xf32> to vector<8x32xf32>
    %96 = arith.subf %74, %95 : vector<8x32xf32>
    %cst_42 = arith.constant 9.99999974E-6 : f32
    %97 = vector.broadcast %cst_42 : f32 to vector<8x1xf32>
    %98 = arith.addf %94, %97 : vector<8x1xf32>
    %99 = math.rsqrt %98 : vector<8x1xf32>
    %100 = vector.broadcast %99 : vector<8x1xf32> to vector<8x32xf32>
    %101 = arith.mulf %96, %100 : vector<8x32xf32>
    %102 = vector.broadcast %80 : vector<1x32xf32> to vector<8x32xf32>
    %103 = arith.mulf %101, %102 : vector<8x32xf32>
    %104 = vector.broadcast %81 : vector<1x32xf32> to vector<8x32xf32>
    %105 = arith.addf %103, %104 : vector<8x32xf32>
    %106 = vector.extract_strided_slice %68 {offsets = [0, 32], sizes = [1, 32], strides = [1, 1]} : vector<1x64xf32> to vector<1x32xf32>
    %107 = vector.extract_strided_slice %69 {offsets = [0, 32], sizes = [1, 32], strides = [1, 1]} : vector<1x64xf32> to vector<1x32xf32>
    %cst_43 = arith.constant dense<0.000000e+00> : vector<8xf32>
    %108 = vector.multi_reduction <add>, %79, %cst_43 [1] : vector<8x32xf32> to vector<8xf32>
    %109 = vector.shape_cast %108 : vector<8xf32> to vector<8x1xf32>
    %cst_44 = arith.constant 3.125000e-02 : f32
    %110 = vector.broadcast %cst_44 : f32 to vector<8x1xf32>
    %111 = arith.mulf %109, %110 : vector<8x1xf32>
    %112 = arith.mulf %79, %79 : vector<8x32xf32>
    %cst_45 = arith.constant dense<0.000000e+00> : vector<8xf32>
    %113 = vector.multi_reduction <add>, %112, %cst_45 [1] : vector<8x32xf32> to vector<8xf32>
    %114 = vector.shape_cast %113 : vector<8xf32> to vector<8x1xf32>
    %cst_46 = arith.constant 3.125000e-02 : f32
    %115 = vector.broadcast %cst_46 : f32 to vector<8x1xf32>
    %116 = arith.mulf %114, %115 : vector<8x1xf32>
    %117 = arith.mulf %111, %111 : vector<8x1xf32>
    %118 = arith.subf %116, %117 : vector<8x1xf32>
    %cst_47 = arith.constant 0.000000e+00 : f32
    %119 = vector.broadcast %cst_47 : f32 to vector<8x1xf32>
    %120 = arith.maximumf %118, %119 : vector<8x1xf32>
    %121 = vector.broadcast %111 : vector<8x1xf32> to vector<8x32xf32>
    %122 = arith.subf %79, %121 : vector<8x32xf32>
    %cst_48 = arith.constant 9.99999974E-6 : f32
    %123 = vector.broadcast %cst_48 : f32 to vector<8x1xf32>
    %124 = arith.addf %120, %123 : vector<8x1xf32>
    %125 = math.rsqrt %124 : vector<8x1xf32>
    %126 = vector.broadcast %125 : vector<8x1xf32> to vector<8x32xf32>
    %127 = arith.mulf %122, %126 : vector<8x32xf32>
    %128 = vector.broadcast %106 : vector<1x32xf32> to vector<8x32xf32>
    %129 = arith.mulf %127, %128 : vector<8x32xf32>
    %130 = vector.broadcast %107 : vector<1x32xf32> to vector<8x32xf32>
    %131 = arith.addf %129, %130 : vector<8x32xf32>
    %c0_49 = arith.constant 0 : index
    %c0_50 = arith.constant 0 : index
    %132 = vector.load %arg12[%c0_49, %c0_50] : memref<4x64xf32, #tpu.memory_space<vmem>>, vector<4x64xf32>
    %cst_51 = arith.constant dense<0.000000e+00> : vector<8x64xf32>
    %133 = tpu.matmul %1, %132, %cst_51 {dimension_numbers = #tpu.dot_dimension_numbers<[1], [0], [0], [1], [0, 0, 1, 1], [], []>} : vector<8x4xf32>, vector<4x64xf32>, vector<8x64xf32> -> vector<8x64xf32>
    %c0_52 = arith.constant 0 : index
    %c0_53 = arith.constant 0 : index
    %134 = vector.load %arg13[%c0_52, %c0_53] : memref<1x64xf32, #tpu.memory_space<vmem>>, vector<1x64xf32>
    %135 = vector.broadcast %134 : vector<1x64xf32> to vector<8x64xf32>
    %136 = arith.addf %133, %135 : vector<8x64xf32>
    %cst_54 = arith.constant 0.000000e+00 : f32
    %137 = vector.broadcast %cst_54 : f32 to vector<8x64xf32>
    %138 = arith.maximumf %136, %137 : vector<8x64xf32>
    %139 = vector.extract_strided_slice %138 {offsets = [0, 0], sizes = [8, 32], strides = [1, 1]} : vector<8x64xf32> to vector<8x32xf32>
    %140 = arith.addf %105, %139 : vector<8x32xf32>
    %cst_55 = arith.constant 0.000000e+00 : f32
    %141 = vector.broadcast %cst_55 : f32 to vector<8x32xf32>
    %142 = arith.maximumf %140, %141 : vector<8x32xf32>
    %143 = vector.extract_strided_slice %138 {offsets = [0, 32], sizes = [8, 32], strides = [1, 1]} : vector<8x64xf32> to vector<8x32xf32>
    %144 = arith.addf %131, %143 : vector<8x32xf32>
    %cst_56 = arith.constant 0.000000e+00 : f32
    %145 = vector.broadcast %cst_56 : f32 to vector<8x32xf32>
    %146 = arith.maximumf %144, %145 : vector<8x32xf32>
    %c0_57 = arith.constant 0 : index
    %c0_58 = arith.constant 0 : index
    %147 = vector.load %arg14[%c0_57, %c0_58] : memref<1x64xf32, #tpu.memory_space<vmem>>, vector<1x64xf32>
    %c0_59 = arith.constant 0 : index
    %c0_60 = arith.constant 0 : index
    %148 = vector.load %arg15[%c0_59, %c0_60] : memref<1x2xf32, #tpu.memory_space<vmem>>, vector<1x2xf32>
    %149 = vector.extract_strided_slice %147 {offsets = [0, 0], sizes = [1, 32], strides = [1, 1]} : vector<1x64xf32> to vector<1x32xf32>
    %150 = vector.broadcast %149 : vector<1x32xf32> to vector<8x32xf32>
    %151 = arith.mulf %142, %150 : vector<8x32xf32>
    %cst_61 = arith.constant dense<0.000000e+00> : vector<8xf32>
    %152 = vector.multi_reduction <add>, %151, %cst_61 [1] : vector<8x32xf32> to vector<8xf32>
    %153 = vector.shape_cast %152 : vector<8xf32> to vector<8x1xf32>
    %154 = vector.extract_strided_slice %148 {offsets = [0, 0], sizes = [1, 1], strides = [1, 1]} : vector<1x2xf32> to vector<1x1xf32>
    %155 = vector.broadcast %154 : vector<1x1xf32> to vector<8x1xf32>
    %156 = arith.addf %153, %155 : vector<8x1xf32>
    %c0_62 = arith.constant 0 : index
    %c0_63 = arith.constant 0 : index
    %157 = vector.load %arg16[%c0_62, %c0_63] : memref<8x2xf32, #tpu.memory_space<vmem>>, vector<8x1xf32>
    tpu.vector_store %arg16[%c0_62, %c0_63], %156 {strides = array<i32>} : memref<8x2xf32, #tpu.memory_space<vmem>>, vector<8x1xf32>,
    %158 = vector.extract_strided_slice %147 {offsets = [0, 32], sizes = [1, 32], strides = [1, 1]} : vector<1x64xf32> to vector<1x32xf32>
    %159 = vector.broadcast %158 : vector<1x32xf32> to vector<8x32xf32>
    %160 = arith.mulf %146, %159 : vector<8x32xf32>
    %cst_64 = arith.constant dense<0.000000e+00> : vector<8xf32>
    %161 = vector.multi_reduction <add>, %160, %cst_64 [1] : vector<8x32xf32> to vector<8xf32>
    %162 = vector.shape_cast %161 : vector<8xf32> to vector<8x1xf32>
    %163 = vector.extract_strided_slice %148 {offsets = [0, 1], sizes = [1, 1], strides = [1, 1]} : vector<1x2xf32> to vector<1x1xf32>
    %164 = vector.broadcast %163 : vector<1x1xf32> to vector<8x1xf32>
    %165 = arith.addf %162, %164 : vector<8x1xf32>
    %c0_65 = arith.constant 0 : index
    %c1 = arith.constant 1 : index
    %166 = vector.load %arg16[%c0_65, %c1] : memref<8x2xf32, #tpu.memory_space<vmem>>, vector<8x1xf32>
    tpu.vector_store %arg16[%c0_65, %c1], %165 {strides = array<i32>} : memref<8x2xf32, #tpu.memory_space<vmem>>, vector<8x1xf32>,
    return
  }
  func.func @transform_0(%arg0: i32) -> (i32, i32) {
    %c0_i32 = arith.constant 0 : i32
    %c0_i32_0 = arith.constant 0 : i32
    return %arg0, %c0_i32 : i32, i32
  }
  func.func @transform_1(%arg0: i32) -> (i32, i32) {
    %c0_i32 = arith.constant 0 : i32
    %c0_i32_0 = arith.constant 0 : i32
    return %arg0, %c0_i32 : i32, i32
  }
  func.func @transform_2(%arg0: i32) -> (i32, i32) {
    %c0_i32 = arith.constant 0 : i32
    %c0_i32_0 = arith.constant 0 : i32
    %c0_i32_1 = arith.constant 0 : i32
    return %c0_i32, %c0_i32_0 : i32, i32
  }
  func.func @transform_3(%arg0: i32) -> (i32, i32) {
    %c0_i32 = arith.constant 0 : i32
    %c0_i32_0 = arith.constant 0 : i32
    %c0_i32_1 = arith.constant 0 : i32
    return %c0_i32, %c0_i32_0 : i32, i32
  }
  func.func @transform_4(%arg0: i32) -> (i32, i32) {
    %c0_i32 = arith.constant 0 : i32
    %c0_i32_0 = arith.constant 0 : i32
    %c0_i32_1 = arith.constant 0 : i32
    return %c0_i32, %c0_i32_0 : i32, i32
  }
  func.func @transform_5(%arg0: i32) -> (i32, i32) {
    %c0_i32 = arith.constant 0 : i32
    %c0_i32_0 = arith.constant 0 : i32
    %c0_i32_1 = arith.constant 0 : i32
    return %c0_i32, %c0_i32_0 : i32, i32
  }
  func.func @transform_6(%arg0: i32) -> (i32, i32) {
    %c0_i32 = arith.constant 0 : i32
    %c0_i32_0 = arith.constant 0 : i32
    %c0_i32_1 = arith.constant 0 : i32
    return %c0_i32, %c0_i32_0 : i32, i32
  }
  func.func @transform_7(%arg0: i32) -> (i32, i32) {
    %c0_i32 = arith.constant 0 : i32
    %c0_i32_0 = arith.constant 0 : i32
    %c0_i32_1 = arith.constant 0 : i32
    return %c0_i32, %c0_i32_0 : i32, i32
  }
  func.func @transform_8(%arg0: i32) -> (i32, i32) {
    %c0_i32 = arith.constant 0 : i32
    %c0_i32_0 = arith.constant 0 : i32
    %c0_i32_1 = arith.constant 0 : i32
    return %c0_i32, %c0_i32_0 : i32, i32
  }
  func.func @transform_9(%arg0: i32) -> (i32, i32) {
    %c0_i32 = arith.constant 0 : i32
    %c0_i32_0 = arith.constant 0 : i32
    %c0_i32_1 = arith.constant 0 : i32
    return %c0_i32, %c0_i32_0 : i32, i32
  }
  func.func @transform_10(%arg0: i32) -> (i32, i32) {
    %c0_i32 = arith.constant 0 : i32
    %c0_i32_0 = arith.constant 0 : i32
    %c0_i32_1 = arith.constant 0 : i32
    return %c0_i32, %c0_i32_0 : i32, i32
  }
  func.func @transform_11(%arg0: i32) -> (i32, i32) {
    %c0_i32 = arith.constant 0 : i32
    %c0_i32_0 = arith.constant 0 : i32
    %c0_i32_1 = arith.constant 0 : i32
    return %c0_i32, %c0_i32_0 : i32, i32
  }
  func.func @transform_12(%arg0: i32) -> (i32, i32) {
    %c0_i32 = arith.constant 0 : i32
    %c0_i32_0 = arith.constant 0 : i32
    %c0_i32_1 = arith.constant 0 : i32
    return %c0_i32, %c0_i32_0 : i32, i32
  }
  func.func @transform_13(%arg0: i32) -> (i32, i32) {
    %c0_i32 = arith.constant 0 : i32
    %c0_i32_0 = arith.constant 0 : i32
    %c0_i32_1 = arith.constant 0 : i32
    return %c0_i32, %c0_i32_0 : i32, i32
  }
  func.func @transform_14(%arg0: i32) -> (i32, i32) {
    %c0_i32 = arith.constant 0 : i32
    %c0_i32_0 = arith.constant 0 : i32
    %c0_i32_1 = arith.constant 0 : i32
    return %c0_i32, %c0_i32_0 : i32, i32
  }
  func.func @transform_15(%arg0: i32) -> (i32, i32) {
    %c0_i32 = arith.constant 0 : i32
    %c0_i32_0 = arith.constant 0 : i32
    return %arg0, %c0_i32 : i32, i32
  }
}

</mosaic_0001>

<llo_original>
// kernel: tpu_custom_call.1
$region0: #{tpu_custom_call.1}
  #allocation0 [shape = 'u32[]', space=smem, size = 0x4, offset = 0x4, fixed_abs, tag = 'smem constant byte address 0x4 - core index']
  #allocation1 [shape = 'u32[144,128]{1,0:T(1,128)}', space=vmem, size = 0x12000, scoped, tag = 'internal scratch']
  %s0 = inlined_call_operand.hbm [shape: f32[8,16], index: 0, kind: input, shape index: {}]
  %s1 = inlined_call_operand.vmem [shape: f32[8,4], index: 1, kind: input, shape index: {}]
  %s2 = inlined_call_operand.hbm [shape: f32[16,64], index: 2, kind: input, shape index: {}]
  %s3 = inlined_call_operand.vmem [shape: f32[1,64], index: 3, kind: input, shape index: {}]
  %s4 = inlined_call_operand.vmem [shape: f32[1,64], index: 4, kind: input, shape index: {}]
  %s5 = inlined_call_operand.hbm [shape: f32[1,64], index: 5, kind: input, shape index: {}]
  %s6 = inlined_call_operand.vmem [shape: f32[32,32], index: 6, kind: input, shape index: {}]
  %s7 = inlined_call_operand.hbm [shape: f32[32,32], index: 7, kind: input, shape index: {}]
  %s8 = inlined_call_operand.vmem [shape: f32[1,64], index: 8, kind: input, shape index: {}]
  %s9 = inlined_call_operand.vmem [shape: f32[1,64], index: 9, kind: input, shape index: {}]
  %s10 = inlined_call_operand.vmem [shape: f32[1,64], index: 10, kind: input, shape index: {}]
  %s11 = inlined_call_operand.vmem [shape: f32[4,64], index: 11, kind: input, shape index: {}]
  %s12 = inlined_call_operand.vmem [shape: f32[1,64], index: 12, kind: input, shape index: {}]
  %s13 = inlined_call_operand.vmem [shape: f32[1,64], index: 13, kind: input, shape index: {}]
  %s14 = inlined_call_operand.vmem [shape: f32[1,2], index: 14, kind: input, shape index: {}]
  %s15 = inlined_call_operand.vmem [shape: f32[8,2], index: 15, kind: output, shape index: {}]
  %s16 = sld [smem:[#allocation0]]
  $region86: #{tpu_custom_call.1} parent=0
    _
  %s18 = ssub.s32 1, %s16
  %s19 = scalar_select 0, %s18, %s16
  $region1: #{tpu_custom_call.1} parent=0
    #allocation2 [shape = 'u8[4096]{0}', space=vmem, size = 0x1000, scoped, tag = 'input window, operand 0, single buffered']
    #allocation3 [shape = 's32[1]{0}', space=sflag, size = 0x4, scoped, tag = 'scoped memory for tpu_custom_call.1']
    #allocation4 [shape = 'u8[8192]{0}', space=vmem, size = 0x2000, scoped, tag = 'input window, operand 2, single buffered']
    #allocation5 [shape = 's32[1]{0}', space=sflag, size = 0x4, scoped, tag = 'scoped memory for tpu_custom_call.1']
    #allocation6 [shape = 'u8[512]{0}', space=vmem, size = 0x400, scoped, tag = 'input window, operand 5, single buffered']
    #allocation7 [shape = 'u8[16384]{0}', space=vmem, size = 0x4000, scoped, tag = 'input window, operand 7, single buffered']
    #allocation8 [shape = 's32[1]{0}', space=sflag, size = 0x4, scoped, tag = 'scoped memory for tpu_custom_call.1']
    %20 = vsyncpa [#allocation3], 0
    %21 = vsyncpa [#allocation5], 0
    %22 = vsyncpa [#allocation8], 0
    // Predicated region
    $region2: #{tpu_custom_call.1} parent=1 // pred_check
      _
    $region3: #{tpu_custom_call.1} parent=1 // pred_check_branch
      %24 = sbr.rel (0) target = $region5
    $region4: #{tpu_custom_call.1} parent=1 // pred_region
      %s26 = ssub.s32 128, 128
      %27 = vsyncadd [#allocation3], %s26
      %s29 = sshll.u32 [#allocation2], 4
      %s30 = int_to_ptr.vmem [resolvable:$true] %s29
      %32 = dma.hbm_to_vmem [thread:$0]  %s0, 128, %s30, [#allocation3]
    $region5: #{tpu_custom_call.1} parent=1 // pred_fallthru
      _
    // Predicated region
    $region6: #{tpu_custom_call.1} parent=1 // pred_check
      _
    $region7: #{tpu_custom_call.1} parent=1 // pred_check_branch
      %34 = sbr.rel (0) target = $region9
    $region8: #{tpu_custom_call.1} parent=1 // pred_region
      _
    $region9: #{tpu_custom_call.1} parent=1 // pred_fallthru
      _
    // Predicated region
    $region10: #{tpu_custom_call.1} parent=1 // pred_check
      _
    $region11: #{tpu_custom_call.1} parent=1 // pred_check_branch
      %36 = sbr.rel (0) target = $region13
    $region12: #{tpu_custom_call.1} parent=1 // pred_region
      %s38 = ssub.s32 256, 256
      %39 = vsyncadd [#allocation5], %s38
      %s40 = sshll.u32 [#allocation4], 4
      %s41 = int_to_ptr.vmem [resolvable:$true] %s40
      %46 = dma.hbm_to_vmem [thread:$0]  %s2, 256, %s41, [#allocation5], 128, 128, 8
    $region13: #{tpu_custom_call.1} parent=1 // pred_fallthru
      _
    // Predicated region
    $region14: #{tpu_custom_call.1} parent=1 // pred_check
      _
    $region15: #{tpu_custom_call.1} parent=1 // pred_check_branch
      %48 = sbr.rel (0) target = $region17
    $region16: #{tpu_custom_call.1} parent=1 // pred_region
      _
    $region17: #{tpu_custom_call.1} parent=1 // pred_fallthru
      _
    // Predicated region
    $region18: #{tpu_custom_call.1} parent=1 // pred_check
      _
    $region19: #{tpu_custom_call.1} parent=1 // pred_check_branch
      %50 = sbr.rel (0) target = $region21
    $region20: #{tpu_custom_call.1} parent=1 // pred_region
      _
    $region21: #{tpu_custom_call.1} parent=1 // pred_fallthru
      _
    // Predicated region
    $region22: #{tpu_custom_call.1} parent=1 // pred_check
      _
    $region23: #{tpu_custom_call.1} parent=1 // pred_check_branch
      %52 = sbr.rel (0) target = $region25
    $region24: #{tpu_custom_call.1} parent=1 // pred_region
      %s54 = ssub.s32 16, 16
      %55 = vsyncadd [#allocation5], %s54
      %s57 = sshll.u32 [#allocation6], 4
      %s58 = int_to_ptr.vmem [resolvable:$true] %s57
      %60 = dma.hbm_to_vmem [thread:$0]  %s5, 16, %s58, [#allocation5]
    $region25: #{tpu_custom_call.1} parent=1 // pred_fallthru
      _
    // Predicated region
    $region26: #{tpu_custom_call.1} parent=1 // pred_check
      _
    $region27: #{tpu_custom_call.1} parent=1 // pred_check_branch
      %62 = sbr.rel (0) target = $region29
    $region28: #{tpu_custom_call.1} parent=1 // pred_region
      _
    $region29: #{tpu_custom_call.1} parent=1 // pred_fallthru
      _
    // Predicated region
    $region30: #{tpu_custom_call.1} parent=1 // pred_check
      _
    $region31: #{tpu_custom_call.1} parent=1 // pred_check_branch
      %64 = sbr.rel (0) target = $region33
    $region32: #{tpu_custom_call.1} parent=1 // pred_region
      %s66 = ssub.s32 512, 512
      %67 = vsyncadd [#allocation8], %s66
      %s68 = sshll.u32 [#allocation7], 4
      %s69 = int_to_ptr.vmem [resolvable:$true] %s68
      %74 = dma.hbm_to_vmem [thread:$0]  %s7, 512, %s69, [#allocation8], 128, 128, 8
    $region33: #{tpu_custom_call.1} parent=1 // pred_fallthru
      _
    // Predicated region
    $region34: #{tpu_custom_call.1} parent=1 // pred_check
      _
    $region35: #{tpu_custom_call.1} parent=1 // pred_check_branch
      %76 = sbr.rel (0) target = $region37
    $region36: #{tpu_custom_call.1} parent=1 // pred_region
      _
    $region37: #{tpu_custom_call.1} parent=1 // pred_fallthru
      _
    // Predicated region
    $region38: #{tpu_custom_call.1} parent=1 // pred_check
      _
    $region39: #{tpu_custom_call.1} parent=1 // pred_check_branch
      %78 = sbr.rel (0) target = $region41
    $region40: #{tpu_custom_call.1} parent=1 // pred_region
      _
    $region41: #{tpu_custom_call.1} parent=1 // pred_fallthru
      _
    // Predicated region
    $region42: #{tpu_custom_call.1} parent=1 // pred_check
      _
    $region43: #{tpu_custom_call.1} parent=1 // pred_check_branch
      %80 = sbr.rel (0) target = $region45
    $region44: #{tpu_custom_call.1} parent=1 // pred_region
      _
    $region45: #{tpu_custom_call.1} parent=1 // pred_fallthru
      _
    // Predicated region
    $region46: #{tpu_custom_call.1} parent=1 // pred_check
      _
    $region47: #{tpu_custom_call.1} parent=1 // pred_check_branch
      %82 = sbr.rel (0) target = $region49
    $region48: #{tpu_custom_call.1} parent=1 // pred_region
      _
    $region49: #{tpu_custom_call.1} parent=1 // pred_fallthru
      _
    // Predicated region
    $region50: #{tpu_custom_call.1} parent=1 // pred_check
      _
    $region51: #{tpu_custom_call.1} parent=1 // pred_check_branch
      %84 = sbr.rel (0) target = $region53
    $region52: #{tpu_custom_call.1} parent=1 // pred_region
      _
    $region53: #{tpu_custom_call.1} parent=1 // pred_fallthru
      _
    // Predicated region
    $region54: #{tpu_custom_call.1} parent=1 // pred_check
      _
    $region55: #{tpu_custom_call.1} parent=1 // pred_check_branch
      %86 = sbr.rel (0) target = $region57
    $region56: #{tpu_custom_call.1} parent=1 // pred_region
      _
    $region57: #{tpu_custom_call.1} parent=1 // pred_fallthru
      _
    // Predicated region
    $region58: #{tpu_custom_call.1} parent=1 // pred_check
      _
    $region59: #{tpu_custom_call.1} parent=1 // pred_check_branch
      %88 = sbr.rel (0) target = $region61
    $region60: #{tpu_custom_call.1} parent=1 // pred_region
      _
    $region61: #{tpu_custom_call.1} parent=1 // pred_fallthru
      _
    // Predicated region
    $region62: #{tpu_custom_call.1} parent=1 // pred_check
      _
    $region63: #{tpu_custom_call.1} parent=1 // pred_check_branch
      %90 = sbr.rel (0) target = $region65
    $region64: #{tpu_custom_call.1} parent=1 // pred_region
      %91 = dma.done [#allocation3], 128
    $region65: #{tpu_custom_call.1} parent=1 // pred_fallthru
      _
    // Predicated region
    $region66: #{tpu_custom_call.1} parent=1 // pred_check
      _
    $region67: #{tpu_custom_call.1} parent=1 // pred_check_branch
      %93 = sbr.rel (0) target = $region69
    $region68: #{tpu_custom_call.1} parent=1 // pred_region
      %94 = dma.done [#allocation5], 256
    $region69: #{tpu_custom_call.1} parent=1 // pred_fallthru
      _
    // Predicated region
    $region70: #{tpu_custom_call.1} parent=1 // pred_check
      _
    $region71: #{tpu_custom_call.1} parent=1 // pred_check_branch
      %96 = sbr.rel (0) target = $region73
    $region72: #{tpu_custom_call.1} parent=1 // pred_region
      %97 = dma.done [#allocation5], 16
    $region73: #{tpu_custom_call.1} parent=1 // pred_fallthru
      _
    // Predicated region
    $region74: #{tpu_custom_call.1} parent=1 // pred_check
      _
    $region75: #{tpu_custom_call.1} parent=1 // pred_check_branch
      %99 = sbr.rel (0) target = $region77
    $region76: #{tpu_custom_call.1} parent=1 // pred_region
      %100 = dma.done [#allocation8], 512
    $region77: #{tpu_custom_call.1} parent=1 // pred_fallthru
      _
    %v101 = vld [vmem:[#allocation2] sm:$0xff]
    %v102 = vld [vmem:[%s1] sm:$0xff]
    %v103 = vld [vmem:[#allocation4] sm:$0xff]
    %v104 = vld [vmem:[#allocation4 + $0x8] sm:$0xff]
    %v105 = vld [vmem:[%s3] sm:$0x1]
    %v107 = vlaneseq
    %v108 = vshrl.u32 %v107, 7
    %v109 = vsub.s32 0, %v108
    %v110 = vrot.slane %v105, %v109
    %vm112 = vcmask 130048
    %v114 = vsel %vm112, %v101, 0
    %116 = vmatprep.subr.mxu0 0.0
    %117 = vmatpush1.msra.mxu0 %v103
    %118 = vmatprep.subr.mxu0 0.0
    %119 = vmatpush1.msra.mxu0 %v104
    %120 = vmatprep.subr.mxu0 0.0
    %121 = vmatpush1.msra.mxu0 0.0
    %122 = vmatprep.subr.mxu0 0.0
    %123 = vmatpush1.msra.mxu0 0.0
    %124 = vmatprep.subr.mxu0 0.0
    %125 = vmatpush1.msra.mxu0 0.0
    %126 = vmatprep.subr.mxu0 0.0
    %127 = vmatpush1.msra.mxu0 0.0
    %128 = vmatprep.subr.mxu0 0.0
    %129 = vmatpush1.msra.mxu0 0.0
    %130 = vmatprep.subr.mxu0 0.0
    %131 = vmatpush1.msra.mxu0 0.0
    %132 = vmatprep.subr.mxu0 0.0
    %133 = vmatpush1.msra.mxu0 0.0
    %134 = vmatprep.subr.mxu0 0.0
    %135 = vmatpush1.msra.mxu0 0.0
    %136 = vmatprep.subr.mxu0 0.0
    %137 = vmatpush1.msra.mxu0 0.0
    %138 = vmatprep.subr.mxu0 0.0
    %139 = vmatpush1.msra.mxu0 0.0
    %140 = vmatprep.subr.mxu0 0.0
    %141 = vmatpush1.msra.mxu0 0.0
    %142 = vmatprep.subr.mxu0 0.0
    %143 = vmatpush1.msra.mxu0 0.0
    %144 = vmatprep.subr.mxu0 0.0
    %145 = vmatpush1.msra.mxu0 0.0
    %146 = vmatprep.subr.mxu0 0.0
    %147 = vmatpush1.msra.mxu0 0.0
    %148 = vmatprep.subr.mxu0 0.0
    %149 = vmatpush1.msra.mxu0 0.0
    %150 = vmatprep.subr.mxu0 0.0
    %151 = vmatpush1.msra.mxu0 0.0
    %152 = vmatprep.subr.mxu0 0.0
    %153 = vmatpush1.msra.mxu0 0.0
    %154 = vmatprep.subr.mxu0 0.0
    %155 = vmatpush1.msra.mxu0 0.0
    %156 = vmatprep.subr.mxu0 0.0
    %157 = vmatpush1.msra.mxu0 0.0
    %158 = vmatprep.subr.mxu0 0.0
    %159 = vmatpush1.msra.mxu0 0.0
    %160 = vmatprep.subr.mxu0 0.0
    %161 = vmatpush1.msra.mxu0 0.0
    %162 = vmatprep.subr.mxu0 0.0
    %163 = vmatpush1.msra.mxu0 0.0
    %164 = vmatprep.subr.mxu0 0.0
    %165 = vmatpush1.msra.mxu0 0.0
    %166 = vmatprep.subr.mxu0 0.0
    %167 = vmatpush1.msra.mxu0 0.0
    %168 = vmatprep.subr.mxu0 0.0
    %169 = vmatpush1.msra.mxu0 0.0
    %170 = vmatprep.subr.mxu0 0.0
    %171 = vmatpush1.msra.mxu0 0.0
    %172 = vmatprep.subr.mxu0 0.0
    %173 = vmatpush1.msra.mxu0 0.0
    %174 = vmatprep.subr.mxu0 0.0
    %175 = vmatpush1.msra.mxu0 0.0
    %176 = vmatprep.subr.mxu0 0.0
    %177 = vmatpush1.msra.mxu0 0.0
    %178 = vmatprep.subr.mxu0 0.0
    %179 = vmatpush1.msra.mxu0 0.0
    %180 = vmatprep.mubr.f32.mxu0 0.0
    %181 = vmatmul.mubr.f32.gmra.mrb[0].mxu0 %v114
    %v182 = vpop.f32.mrb[0].mxu0
    %v183 = vadd.f32 %v110, %v182
    %v184 = vpop.f32.mrb[0].mxu0
    %185 = vdwg.mxu0
    %v186 = vld [vmem:[%s4] sm:$0x1]
    %v187 = vld [vmem:[#allocation6] sm:$0x1]
    %vm188 = vcmask 261120
    %v189 = vsel %vm188, %v183, 0.0
    %190 = vadd.xlane.f32.xlu0 %v189
    %v191 = vpop.xlane.xlu0 %190
    %v192 = vmul.f32 %v191, 0.03125
    %v193 = vmul.f32 %v183, %v183
    %v194 = vsel %vm188, %v193, 0.0
    %195 = vadd.xlane.f32.xlu0 %v194
    %v196 = vpop.xlane.xlu0 %195
    %v197 = vmul.f32 %v196, 0.03125
    %v198 = vmul.f32 %v192, %v192
    %v199 = vsub.f32 %v197, %v198
    %v200 = vmax.f32 %v199, 0.0
    %v201 = vsub.f32 %v183, %v192
    %v202 = vadd.f32 %v200, 1e-05
    %v203 = vrsqrt.pop %v202
    %v204 = vmul.f32 %v201, %v203
    %v206 = vlaneseq
    %v207 = vshrl.u32 %v206, 7
    %v208 = vsub.s32 0, %v207
    %v209 = vrot.slane %v186, %v208
    %v211 = vmul.f32 %v204, %v209
    %v213 = vlaneseq
    %v214 = vshrl.u32 %v213, 7
    %v215 = vsub.s32 0, %v214
    %v216 = vrot.slane %v187, %v215
    %v218 = vadd.f32 %v211, %v216
    %v219 = vmax.f32 %v218, 0.0
    %221 = vrot.lane.b32.xlu0 %v183, 96
    %v222 = vpop.permute.xlu0 %221
    %v224 = vsel %vm188, %v222, 0.0
    %225 = vadd.xlane.f32.xlu0 %v224
    %v226 = vpop.xlane.xlu0 %225
    %v227 = vmul.f32 %v226, 0.03125
    %229 = vrot.lane.b32.xlu0 %v193, 96
    %v230 = vpop.permute.xlu0 %229
    %v232 = vsel %vm188, %v230, 0.0
    %233 = vadd.xlane.f32.xlu0 %v232
    %v234 = vpop.xlane.xlu0 %233
    %v235 = vmul.f32 %v234, 0.03125
    %v236 = vmul.f32 %v227, %v227
    %v237 = vsub.f32 %v235, %v236
    %v238 = vmax.f32 %v237, 0.0
    %v239 = vsub.f32 %v183, %v227
    %v240 = vadd.f32 %v238, 1e-05
    %v241 = vrsqrt.pop %v240
    %v242 = vmul.f32 %v239, %v241
    %v243 = vmul.f32 %v242, %v209
    %v244 = vadd.f32 %v243, %v216
    %v245 = vmax.f32 %v244, 0.0
    %v246 = vld [vmem:[%s8] sm:$0x1]
    %v247 = vld [vmem:[%s9] sm:$0x1]
    %v248 = vld [vmem:[%s10] sm:$0x1]
    %v249 = vld [vmem:[%s6] sm:$0xff]
    %v250 = vld [vmem:[%s6 + $0x8] sm:$0xff]
    %v251 = vld [vmem:[%s6 + $0x10] sm:$0xff]
    %v252 = vld [vmem:[%s6 + $0x18] sm:$0xff]
    %v254 = vlaneseq
    %v255 = vshrl.u32 %v254, 7
    %v256 = vsub.s32 0, %v255
    %v257 = vrot.slane %v246, %v256
    %v260 = vsel %vm188, %v219, 0
    %262 = vmatprep.subr.mxu0 0.0
    %263 = vmatpush1.msra.mxu0 %v249
    %264 = vmatprep.subr.mxu0 0.0
    %265 = vmatpush1.msra.mxu0 %v250
    %266 = vmatprep.subr.mxu0 0.0
    %267 = vmatpush1.msra.mxu0 %v251
    %268 = vmatprep.subr.mxu0 0.0
    %269 = vmatpush1.msra.mxu0 %v252
    %270 = vmatprep.subr.mxu0 0.0
    %271 = vmatpush1.msra.mxu0 0.0
    %272 = vmatprep.subr.mxu0 0.0
    %273 = vmatpush1.msra.mxu0 0.0
    %274 = vmatprep.subr.mxu0 0.0
    %275 = vmatpush1.msra.mxu0 0.0
    %276 = vmatprep.subr.mxu0 0.0
    %277 = vmatpush1.msra.mxu0 0.0
    %278 = vmatprep.subr.mxu0 0.0
    %279 = vmatpush1.msra.mxu0 0.0
    %280 = vmatprep.subr.mxu0 0.0
    %281 = vmatpush1.msra.mxu0 0.0
    %282 = vmatprep.subr.mxu0 0.0
    %283 = vmatpush1.msra.mxu0 0.0
    %284 = vmatprep.subr.mxu0 0.0
    %285 = vmatpush1.msra.mxu0 0.0
    %286 = vmatprep.subr.mxu0 0.0
    %287 = vmatpush1.msra.mxu0 0.0
    %288 = vmatprep.subr.mxu0 0.0
    %289 = vmatpush1.msra.mxu0 0.0
    %290 = vmatprep.subr.mxu0 0.0
    %291 = vmatpush1.msra.mxu0 0.0
    %292 = vmatprep.subr.mxu0 0.0
    %293 = vmatpush1.msra.mxu0 0.0
    %294 = vmatprep.subr.mxu0 0.0
    %295 = vmatpush1.msra.mxu0 0.0
    %296 = vmatprep.subr.mxu0 0.0
    %297 = vmatpush1.msra.mxu0 0.0
    %298 = vmatprep.subr.mxu0 0.0
    %299 = vmatpush1.msra.mxu0 0.0
    %300 = vmatprep.subr.mxu0 0.0
    %301 = vmatpush1.msra.mxu0 0.0
    %302 = vmatprep.subr.mxu0 0.0
    %303 = vmatpush1.msra.mxu0 0.0
    %304 = vmatprep.subr.mxu0 0.0
    %305 = vmatpush1.msra.mxu0 0.0
    %306 = vmatprep.subr.mxu0 0.0
    %307 = vmatpush1.msra.mxu0 0.0
    %308 = vmatprep.subr.mxu0 0.0
    %309 = vmatpush1.msra.mxu0 0.0
    %310 = vmatprep.subr.mxu0 0.0
    %311 = vmatpush1.msra.mxu0 0.0
    %312 = vmatprep.subr.mxu0 0.0
    %313 = vmatpush1.msra.mxu0 0.0
    %314 = vmatprep.subr.mxu0 0.0
    %315 = vmatpush1.msra.mxu0 0.0
    %316 = vmatprep.subr.mxu0 0.0
    %317 = vmatpush1.msra.mxu0 0.0
    %318 = vmatprep.subr.mxu0 0.0
    %319 = vmatpush1.msra.mxu0 0.0
    %320 = vmatprep.subr.mxu0 0.0
    %321 = vmatpush1.msra.mxu0 0.0
    %322 = vmatprep.subr.mxu0 0.0
    %323 = vmatpush1.msra.mxu0 0.0
    %324 = vmatprep.subr.mxu0 0.0
    %325 = vmatpush1.msra.mxu0 0.0
    %326 = vmatprep.mubr.f32.mxu0 0.0
    %327 = vmatmul.mubr.f32.gmra.mrb[0].mxu0 %v260
    %v328 = vpop.f32.mrb[0].mxu0
    %v329 = vadd.f32 %v257, %v328
    %v330 = vpop.f32.mrb[0].mxu0
    %331 = vdwg.mxu0
    %v332 = vld [vmem:[#allocation7] sm:$0xff]
    %v333 = vld [vmem:[#allocation7 + $0x8] sm:$0xff]
    %v334 = vld [vmem:[#allocation7 + $0x10] sm:$0xff]
    %v335 = vld [vmem:[#allocation7 + $0x18] sm:$0xff]
    %337 = vrot.lane.b32.xlu0 %v245, 96
    %v338 = vpop.permute.xlu0 %337
    %339 = vrot.lane.b32.xlu0 %v257, 96
    %v340 = vpop.permute.xlu0 %339
    %v342 = vsel %vm188, %v338, 0
    %344 = vmatprep.subr.mxu0 0.0
    %345 = vmatpush1.msra.mxu0 %v332
    %346 = vmatprep.subr.mxu0 0.0
    %347 = vmatpush1.msra.mxu0 %v333
    %348 = vmatprep.subr.mxu0 0.0
    %349 = vmatpush1.msra.mxu0 %v334
    %350 = vmatprep.subr.mxu0 0.0
    %351 = vmatpush1.msra.mxu0 %v335
    %352 = vmatprep.subr.mxu0 0.0
    %353 = vmatpush1.msra.mxu0 0.0
    %354 = vmatprep.subr.mxu0 0.0
    %355 = vmatpush1.msra.mxu0 0.0
    %356 = vmatprep.subr.mxu0 0.0
    %357 = vmatpush1.msra.mxu0 0.0
    %358 = vmatprep.subr.mxu0 0.0
    %359 = vmatpush1.msra.mxu0 0.0
    %360 = vmatprep.subr.mxu0 0.0
    %361 = vmatpush1.msra.mxu0 0.0
    %362 = vmatprep.subr.mxu0 0.0
    %363 = vmatpush1.msra.mxu0 0.0
    %364 = vmatprep.subr.mxu0 0.0
    %365 = vmatpush1.msra.mxu0 0.0
    %366 = vmatprep.subr.mxu0 0.0
    %367 = vmatpush1.msra.mxu0 0.0
    %368 = vmatprep.subr.mxu0 0.0
    %369 = vmatpush1.msra.mxu0 0.0
    %370 = vmatprep.subr.mxu0 0.0
    %371 = vmatpush1.msra.mxu0 0.0
    %372 = vmatprep.subr.mxu0 0.0
    %373 = vmatpush1.msra.mxu0 0.0
    %374 = vmatprep.subr.mxu0 0.0
    %375 = vmatpush1.msra.mxu0 0.0
    %376 = vmatprep.subr.mxu0 0.0
    %377 = vmatpush1.msra.mxu0 0.0
    %378 = vmatprep.subr.mxu0 0.0
    %379 = vmatpush1.msra.mxu0 0.0
    %380 = vmatprep.subr.mxu0 0.0
    %381 = vmatpush1.msra.mxu0 0.0
    %382 = vmatprep.subr.mxu0 0.0
    %383 = vmatpush1.msra.mxu0 0.0
    %384 = vmatprep.subr.mxu0 0.0
    %385 = vmatpush1.msra.mxu0 0.0
    %386 = vmatprep.subr.mxu0 0.0
    %387 = vmatpush1.msra.mxu0 0.0
    %388 = vmatprep.subr.mxu0 0.0
    %389 = vmatpush1.msra.mxu0 0.0
    %390 = vmatprep.subr.mxu0 0.0
    %391 = vmatpush1.msra.mxu0 0.0
    %392 = vmatprep.subr.mxu0 0.0
    %393 = vmatpush1.msra.mxu0 0.0
    %394 = vmatprep.subr.mxu0 0.0
    %395 = vmatpush1.msra.mxu0 0.0
    %396 = vmatprep.subr.mxu0 0.0
    %397 = vmatpush1.msra.mxu0 0.0
    %398 = vmatprep.subr.mxu0 0.0
    %399 = vmatpush1.msra.mxu0 0.0
    %400 = vmatprep.subr.mxu0 0.0
    %401 = vmatpush1.msra.mxu0 0.0
    %402 = vmatprep.subr.mxu0 0.0
    %403 = vmatpush1.msra.mxu0 0.0
    %404 = vmatprep.subr.mxu0 0.0
    %405 = vmatpush1.msra.mxu0 0.0
    %406 = vmatprep.subr.mxu0 0.0
    %407 = vmatpush1.msra.mxu0 0.0
    %408 = vmatprep.mubr.f32.mxu0 0.0
    %409 = vmatmul.mubr.f32.gmra.mrb[0].mxu0 %v342
    %v410 = vpop.f32.mrb[0].mxu0
    %v411 = vadd.f32 %v340, %v410
    %v412 = vpop.f32.mrb[0].mxu0
    %413 = vdwg.mxu0
    %v414 = vsel %vm188, %v329, 0.0
    %415 = vadd.xlane.f32.xlu0 %v414
    %v416 = vpop.xlane.xlu0 %415
    %v417 = vmul.f32 %v416, 0.03125
    %v418 = vmul.f32 %v329, %v329
    %v419 = vsel %vm188, %v418, 0.0
    %420 = vadd.xlane.f32.xlu0 %v419
    %v421 = vpop.xlane.xlu0 %420
    %v422 = vmul.f32 %v421, 0.03125
    %v423 = vmul.f32 %v417, %v417
    %v424 = vsub.f32 %v422, %v423
    %v425 = vmax.f32 %v424, 0.0
    %v426 = vsub.f32 %v329, %v417
    %v427 = vadd.f32 %v425, 1e-05
    %v428 = vrsqrt.pop %v427
    %v429 = vmul.f32 %v426, %v428
    %v431 = vlaneseq
    %v432 = vshrl.u32 %v431, 7
    %v433 = vsub.s32 0, %v432
    %v434 = vrot.slane %v247, %v433
    %v436 = vmul.f32 %v429, %v434
    %v438 = vlaneseq
    %v439 = vshrl.u32 %v438, 7
    %v440 = vsub.s32 0, %v439
    %v441 = vrot.slane %v248, %v440
    %v443 = vadd.f32 %v436, %v441
    %v444 = vsel %vm188, %v411, 0.0
    %445 = vadd.xlane.f32.xlu0 %v444
    %v446 = vpop.xlane.xlu0 %445
    %v447 = vmul.f32 %v446, 0.03125
    %v448 = vmul.f32 %v411, %v411
    %v449 = vsel %vm188, %v448, 0.0
    %450 = vadd.xlane.f32.xlu0 %v449
    %v451 = vpop.xlane.xlu0 %450
    %v452 = vmul.f32 %v451, 0.03125
    %v453 = vmul.f32 %v447, %v447
    %v454 = vsub.f32 %v452, %v453
    %v455 = vmax.f32 %v454, 0.0
    %v456 = vsub.f32 %v411, %v447
    %v457 = vadd.f32 %v455, 1e-05
    %v458 = vrsqrt.pop %v457
    %v459 = vmul.f32 %v456, %v458
    %460 = vrot.lane.b32.xlu0 %v434, 96
    %v461 = vpop.permute.xlu0 %460
    %v463 = vmul.f32 %v459, %v461
    %464 = vrot.lane.b32.xlu0 %v441, 96
    %v465 = vpop.permute.xlu0 %464
    %v467 = vadd.f32 %v463, %v465
    %v468 = vld [vmem:[%s11] sm:$0xf]
    %v469 = vld [vmem:[%s12] sm:$0x1]
    %v471 = vlaneseq
    %v472 = vshrl.u32 %v471, 7
    %v473 = vsub.s32 0, %v472
    %v474 = vrot.slane %v469, %v473
    %vm476 = vcmask 31744
    %v478 = vsel %vm476, %v102, 0
    %vm480 = vcmask 1043456
    %v482 = vsel %vm480, %v468, 0
    %484 = vmatprep.subr.mxu0 0.0
    %485 = vmatpush1.msra.mxu0 %v482
    %486 = vmatprep.subr.mxu0 0.0
    %487 = vmatpush1.msra.mxu0 0.0
    %488 = vmatprep.subr.mxu0 0.0
    %489 = vmatpush1.msra.mxu0 0.0
    %490 = vmatprep.subr.mxu0 0.0
    %491 = vmatpush1.msra.mxu0 0.0
    %492 = vmatprep.subr.mxu0 0.0
    %493 = vmatpush1.msra.mxu0 0.0
    %494 = vmatprep.subr.mxu0 0.0
    %495 = vmatpush1.msra.mxu0 0.0
    %496 = vmatprep.subr.mxu0 0.0
    %497 = vmatpush1.msra.mxu0 0.0
    %498 = vmatprep.subr.mxu0 0.0
    %499 = vmatpush1.msra.mxu0 0.0
    %500 = vmatprep.subr.mxu0 0.0
    %501 = vmatpush1.msra.mxu0 0.0
    %502 = vmatprep.subr.mxu0 0.0
    %503 = vmatpush1.msra.mxu0 0.0
    %504 = vmatprep.subr.mxu0 0.0
    %505 = vmatpush1.msra.mxu0 0.0
    %506 = vmatprep.subr.mxu0 0.0
    %507 = vmatpush1.msra.mxu0 0.0
    %508 = vmatprep.subr.mxu0 0.0
    %509 = vmatpush1.msra.mxu0 0.0
    %510 = vmatprep.subr.mxu0 0.0
    %511 = vmatpush1.msra.mxu0 0.0
    %512 = vmatprep.subr.mxu0 0.0
    %513 = vmatpush1.msra.mxu0 0.0
    %514 = vmatprep.subr.mxu0 0.0
    %515 = vmatpush1.msra.mxu0 0.0
    %516 = vmatprep.subr.mxu0 0.0
    %517 = vmatpush1.msra.mxu0 0.0
    %518 = vmatprep.subr.mxu0 0.0
    %519 = vmatpush1.msra.mxu0 0.0
    %520 = vmatprep.subr.mxu0 0.0
    %521 = vmatpush1.msra.mxu0 0.0
    %522 = vmatprep.subr.mxu0 0.0
    %523 = vmatpush1.msra.mxu0 0.0
    %524 = vmatprep.subr.mxu0 0.0
    %525 = vmatpush1.msra.mxu0 0.0
    %526 = vmatprep.subr.mxu0 0.0
    %527 = vmatpush1.msra.mxu0 0.0
    %528 = vmatprep.subr.mxu0 0.0
    %529 = vmatpush1.msra.mxu0 0.0
    %530 = vmatprep.subr.mxu0 0.0
    %531 = vmatpush1.msra.mxu0 0.0
    %532 = vmatprep.subr.mxu0 0.0
    %533 = vmatpush1.msra.mxu0 0.0
    %534 = vmatprep.subr.mxu0 0.0
    %535 = vmatpush1.msra.mxu0 0.0
    %536 = vmatprep.subr.mxu0 0.0
    %537 = vmatpush1.msra.mxu0 0.0
    %538 = vmatprep.subr.mxu0 0.0
    %539 = vmatpush1.msra.mxu0 0.0
    %540 = vmatprep.subr.mxu0 0.0
    %541 = vmatpush1.msra.mxu0 0.0
    %542 = vmatprep.subr.mxu0 0.0
    %543 = vmatpush1.msra.mxu0 0.0
    %544 = vmatprep.subr.mxu0 0.0
    %545 = vmatpush1.msra.mxu0 0.0
    %546 = vmatprep.subr.mxu0 0.0
    %547 = vmatpush1.msra.mxu0 0.0
    %548 = vmatprep.mubr.f32.mxu0 0.0
    %549 = vmatmul.mubr.f32.gmra.mrb[0].mxu0 %v478
    %v550 = vpop.f32.mrb[0].mxu0
    %v551 = vadd.f32 %v474, %v550
    %v552 = vpop.f32.mrb[0].mxu0
    %553 = vdwg.mxu0
    %v554 = vmax.f32 %v551, 0.0
    %v555 = vadd.f32 %v443, %v554
    %v556 = vmax.f32 %v555, 0.0
    %558 = vrot.lane.b32.xlu0 %v554, 96
    %v559 = vpop.permute.xlu0 %558
    %v561 = vadd.f32 %v467, %v559
    %v562 = vmax.f32 %v561, 0.0
    %v563 = vld [vmem:[%s13] sm:$0x1]
    %v564 = vld [vmem:[%s14] sm:$0x1]
    %v566 = vlaneseq
    %v567 = vshrl.u32 %v566, 7
    %v568 = vsub.s32 0, %v567
    %v569 = vrot.slane %v563, %v568
    %v571 = vmul.f32 %v556, %v569
    %v572 = vsel %vm188, %v571, 0.0
    %573 = vadd.xlane.f32.xlu0 %v572
    %v574 = vpop.xlane.xlu0 %573
    %v576 = vlaneseq
    %v577 = vshrl.u32 %v576, 7
    %v578 = vsub.s32 0, %v577
    %v579 = vrot.slane %v564, %v578
    %v581 = vadd.f32 %v574, %v579
    %vm582 = vcmask 7168
    %583 = vst.msk [vmem:[%s15] sm:$0xff] %vm582, %v581
    %584 = vrot.lane.b32.xlu0 %v569, 96
    %v585 = vpop.permute.xlu0 %584
    %v587 = vmul.f32 %v562, %v585
    %v588 = vsel %vm188, %v587, 0.0
    %589 = vadd.xlane.f32.xlu0 %v588
    %v590 = vpop.xlane.xlu0 %589
    %v591 = vadd.f32 %v590, %v579
    %vm592 = vcmask 15368
    %593 = vst.msk [vmem:[%s15] sm:$0xff] %vm592, %v591
    // Predicated region
    $region78: #{tpu_custom_call.1} parent=1 // pred_check
      _
    $region79: #{tpu_custom_call.1} parent=1 // pred_check_branch
      %595 = sbr.rel (0) target = $region81
    $region80: #{tpu_custom_call.1} parent=1 // pred_region
      _
    $region81: #{tpu_custom_call.1} parent=1 // pred_fallthru
      _
    // Predicated region
    $region82: #{tpu_custom_call.1} parent=1 // pred_check
      _
    $region83: #{tpu_custom_call.1} parent=1 // pred_check_branch
      %597 = sbr.rel (0) target = $region85
    $region84: #{tpu_custom_call.1} parent=1 // pred_region
      _
    $region85: #{tpu_custom_call.1} parent=1 // pred_fallthru
      _
    %598 = vsyncpa [#allocation3], 1
    %599 = vsyncpa [#allocation5], 1
    %600 = vsyncpa [#allocation8], 1

</llo_original>
